<compile_context>
chip_gen: v7x
topology: tpu7x:2x2x1
jax: 0.10.0
libtpu: 0.0.40
codegen_flags: <defaults>
</compile_context>

<pallas_src>
import jax
import jax.numpy as jnp
from jax.experimental import pallas as pl
from jax.experimental.pallas import tpu as pltpu

BIT_WIDTH = 8
DSCALE = 10.0   # scale        (input0)
WSCALE = 10.0   # scale_weight (input1)
OSCALE = 10.0   # scale_out
QMIN = -(2.0 ** (BIT_WIDTH - 1))
QMAX = 2.0 ** (BIT_WIDTH - 1) - 1.0

LANES = 128          # lane width of the flattened slab (vreg fast axis)
TR_MAX = 8192        # max rows/block: 8192*128*4B = 4 MiB per f32 array per block
MIN_STEPS = 4        # aim for >= 4 pipeline steps on mid/large slabs
SMALL_ROWS = 512     # below this, one full-extent block (step overhead dominates)
VMEM_LIMIT = 48 << 20  # 3 arrays x 2 buffers x 4 MiB = 24 MiB live; safe on v5e/v6e/v7x


def _quant(x, scale):
    return jnp.clip(jnp.round(x * jnp.float32(scale)), QMIN, QMAX)


def matadd_kernel(a_ref, b_ref, o_ref):
    # Widen in-VMEM (inputs are streamed in their original dtype).
    a = a_ref[...].astype(jnp.float32)
    b = b_ref[...].astype(jnp.float32)
    qa = _quant(a, DSCALE)
    qb = _quant(b, WSCALE)
    o_ref[...] = ((qa + qb) / jnp.float32(OSCALE)).astype(o_ref.dtype)


def _pick_block_rows(rows: int) -> int:
    # Small slabs: a single full-extent block is always a legal block shape
    # and the ~0.35us fixed per-step overhead would dominate multi-stepping.
    if rows <= SMALL_ROWS:
        return rows
    # Otherwise aim for >= MIN_STEPS pipeline steps, capped at TR_MAX rows,
    # sublane-aligned so the (8, 128) tiling constraint holds.
    tr = min(TR_MAX, pl.cdiv(rows, MIN_STEPS))
    return max(8, (tr // 8) * 8)


def _matadd_bulk(a2, b2):
    rows = a2.shape[0]
    tr = _pick_block_rows(rows)
    grid = (pl.cdiv(rows, tr),)
    itemsize = jnp.dtype(a2.dtype).itemsize
    cost = pl.CostEstimate(
        flops=10 * rows * LANES,                    # ~10 VPU ops / element
        transcendentals=0,
        bytes_accessed=3 * rows * LANES * itemsize,  # 2 reads + 1 write
    )
    return pl.pallas_call(
        matadd_kernel,
        out_shape=jax.ShapeDtypeStruct((rows, LANES), a2.dtype),
        grid=grid,
        in_specs=[
            pl.BlockSpec((tr, LANES), lambda i: (i, 0)),
            pl.BlockSpec((tr, LANES), lambda i: (i, 0)),
        ],
        out_specs=pl.BlockSpec((tr, LANES), lambda i: (i, 0)),
        compiler_params=pltpu.CompilerParams(
            # Pure elementwise, no carry.  On v7x this axis can be switched to
            # pltpu.CORE_PARALLEL to shard grid steps across both TensorCores.
            dimension_semantics=("parallel",),
            vmem_limit_bytes=VMEM_LIMIT,
        ),
        cost_estimate=cost,
    )(a2, b2)


def matadd(input0, input1):
    assert input0.shape == input1.shape, "MatAdd requires matching shapes"
    orig_shape = input0.shape
    dtype = input0.dtype

    a = input0.reshape(-1)   # free bitcast; keep original dtype (widen in-kernel)
    b = input1.reshape(-1)
    n = a.shape[0]
    n_bulk = (n // LANES) * LANES
    tail = n - n_bulk

    pieces = []
    if n_bulk:
        a_bulk = a if tail == 0 else a[:n_bulk]
        b_bulk = b if tail == 0 else b[:n_bulk]
        out2 = _matadd_bulk(
            a_bulk.reshape(n_bulk // LANES, LANES),
            b_bulk.reshape(n_bulk // LANES, LANES),
        )
        pieces.append(out2.reshape(-1))
    if tail:
        # < 128 leftover elements: negligible work, do it with plain jnp
        # instead of padding (and copying) the full inputs through HBM.
        qt = (_quant(a[n_bulk:].astype(jnp.float32), DSCALE)
              + _quant(b[n_bulk:].astype(jnp.float32), WSCALE))
        pieces.append((qt / jnp.float32(OSCALE)).astype(dtype))

    out = pieces[0] if len(pieces) == 1 else jnp.concatenate(pieces)
    return out.reshape(orig_shape)


def matadd_ref(input0, input1):
    qa = _quant(input0.astype(jnp.float32), DSCALE)
    qb = _quant(input1.astype(jnp.float32), WSCALE)
    return ((qa + qb) / jnp.float32(OSCALE)).astype(input0.dtype)


if __name__ == "__main__":
    key = jax.random.PRNGKey(0)
    k0, k1 = jax.random.split(key)
    # NCHW inputs, small shapes.
    x0 = jax.random.normal(k0, (2, 4, 16, 16), dtype=jnp.float32) * 3.0
    x1 = jax.random.normal(k1, (2, 4, 16, 16), dtype=jnp.float32) * 3.0

    out = jax.jit(matadd)(x0, x1)
    jax.block_until_ready(out)

    ref = matadd_ref(x0, x1)
    assert out.shape == x0.shape and out.dtype == x0.dtype
    assert jnp.allclose(out, ref, atol=1e-5, rtol=1e-6), "mismatch vs reference"

    print("KERNEL_OK")
</pallas_src>

<mosaic_0001>
module attributes {stable_mosaic.version = 11 : i64} {
  func.func @matadd_kernel(%arg0: i32, %arg1: memref<16x128xf32, #tpu.memory_space<vmem>>, %arg2: memref<16x128xf32, #tpu.memory_space<vmem>>, %arg3: memref<16x128xf32, #tpu.memory_space<vmem>>) attributes {dimension_semantics = [#tpu.dimension_semantics<parallel>], iteration_bounds = array<i64: 1>, scalar_prefetch = 0 : i64, scratch_operands = 0 : i64, tpu.core_type = #tpu.core_type<tc>, window_params = [{transform_indices = @transform_0, window_bounds = array<i64: 16, 128>}, {transform_indices = @transform_1, window_bounds = array<i64: 16, 128>}, {transform_indices = @transform_2, window_bounds = array<i64: 16, 128>}]} {
    %c0 = arith.constant 0 : index
    %c0_0 = arith.constant 0 : index
    %0 = vector.load %arg1[%c0, %c0_0] : memref<16x128xf32, #tpu.memory_space<vmem>>, vector<16x128xf32>
    %c0_1 = arith.constant 0 : index
    %c0_2 = arith.constant 0 : index
    %1 = vector.load %arg2[%c0_1, %c0_2] : memref<16x128xf32, #tpu.memory_space<vmem>>, vector<16x128xf32>
    %cst = arith.constant 1.000000e+01 : f32
    %2 = vector.broadcast %cst : f32 to vector<16x128xf32>
    %3 = arith.mulf %0, %2 : vector<16x128xf32>
    %4 = math.roundeven %3 : vector<16x128xf32>
    %cst_3 = arith.constant -1.280000e+02 : f32
    %cst_4 = arith.constant 1.270000e+02 : f32
    %5 = vector.broadcast %cst_3 : f32 to vector<16x128xf32>
    %6 = arith.maximumf %5, %4 : vector<16x128xf32>
    %7 = vector.broadcast %cst_4 : f32 to vector<16x128xf32>
    %8 = arith.minimumf %7, %6 : vector<16x128xf32>
    %cst_5 = arith.constant 1.000000e+01 : f32
    %9 = vector.broadcast %cst_5 : f32 to vector<16x128xf32>
    %10 = arith.mulf %1, %9 : vector<16x128xf32>
    %11 = math.roundeven %10 : vector<16x128xf32>
    %cst_6 = arith.constant -1.280000e+02 : f32
    %cst_7 = arith.constant 1.270000e+02 : f32
    %12 = vector.broadcast %cst_6 : f32 to vector<16x128xf32>
    %13 = arith.maximumf %12, %11 : vector<16x128xf32>
    %14 = vector.broadcast %cst_7 : f32 to vector<16x128xf32>
    %15 = arith.minimumf %14, %13 : vector<16x128xf32>
    %16 = arith.addf %8, %15 : vector<16x128xf32>
    %cst_8 = arith.constant 1.000000e+01 : f32
    %17 = vector.broadcast %cst_8 : f32 to vector<16x128xf32>
    %18 = arith.divf %16, %17 : vector<16x128xf32>
    %c0_9 = arith.constant 0 : index
    %c0_10 = arith.constant 0 : index
    %19 = vector.load %arg3[%c0_9, %c0_10] : memref<16x128xf32, #tpu.memory_space<vmem>>, vector<16x128xf32>
    tpu.vector_store %arg3[%c0_9, %c0_10], %18 {strides = array<i32>} : memref<16x128xf32, #tpu.memory_space<vmem>>, vector<16x128xf32>,
    return
  }
  func.func @transform_0(%arg0: i32) -> (i32, i32) {
    %c0_i32 = arith.constant 0 : i32
    %c0_i32_0 = arith.constant 0 : i32
    return %arg0, %c0_i32 : i32, i32
  }
  func.func @transform_1(%arg0: i32) -> (i32, i32) {
    %c0_i32 = arith.constant 0 : i32
    %c0_i32_0 = arith.constant 0 : i32
    return %arg0, %c0_i32 : i32, i32
  }
  func.func @transform_2(%arg0: i32) -> (i32, i32) {
    %c0_i32 = arith.constant 0 : i32
    %c0_i32_0 = arith.constant 0 : i32
    return %arg0, %c0_i32 : i32, i32
  }
}

</mosaic_0001>

<llo_original>
// kernel: matadd.1
$region0: #{matadd.1}
  #allocation0 [shape = 'u32[]', space=smem, size = 0x4, offset = 0x4, fixed_abs, tag = 'smem constant byte address 0x4 - core index']
  #allocation1 [shape = 'u32[144,128]{1,0:T(1,128)}', space=vmem, size = 0x12000, scoped, tag = 'internal scratch']
  %s0 = inlined_call_operand.vmem [shape: f32[16,128], index: 0, kind: input, shape index: {}]
  %s1 = inlined_call_operand.vmem [shape: f32[16,128], index: 1, kind: input, shape index: {}]
  %s2 = inlined_call_operand.vmem [shape: f32[16,128], index: 2, kind: output, shape index: {}]
  %s3 = sld [smem:[#allocation0]]
  $region18: #{matadd.1} parent=0
    _
  %s5 = ssub.s32 1, %s3
  %s6 = scalar_select 0, %s5, %s3
  // Predicated region
  $region2: #{matadd.1} parent=0 // pred_check
    _
  $region3: #{matadd.1} parent=0 // pred_check_branch
    %8 = sbr.rel (0) target = $region5
  $region4: #{matadd.1} parent=0 // pred_region
    _
  $region5: #{matadd.1} parent=0 // pred_fallthru
    _
  // Predicated region
  $region6: #{matadd.1} parent=0 // pred_check
    _
  $region7: #{matadd.1} parent=0 // pred_check_branch
    %10 = sbr.rel (0) target = $region9
  $region8: #{matadd.1} parent=0 // pred_region
    _
  $region9: #{matadd.1} parent=0 // pred_fallthru
    _
  %v11 = vld [vmem:[%s0] sm:$0xff]
  %v12 = vld [vmem:[%s0 + $0x8] sm:$0xff]
  %v13 = vld [vmem:[%s1] sm:$0xff]
  %v14 = vld [vmem:[%s1 + $0x8] sm:$0xff]
  %v15 = vmul.f32 %v11, 10.0
  %v16 = vmul.f32 %v12, 10.0
  %v17 = vround.ne.pseudo %v15
  %v18 = vround.ne.pseudo %v16
  %v19 = vmax.f32 %v17, -128.0
  %v20 = vmax.f32 %v18, -128.0
  %v21 = vmin.f32 %v19, 127.0
  %v22 = vmin.f32 %v20, 127.0
  %v23 = vmul.f32 %v13, 10.0
  %v24 = vmul.f32 %v14, 10.0
  %v25 = vround.ne.pseudo %v23
  %v26 = vround.ne.pseudo %v24
  %v27 = vmax.f32 %v25, -128.0
  %v28 = vmax.f32 %v26, -128.0
  %v29 = vmin.f32 %v27, 127.0
  %v30 = vmin.f32 %v28, 127.0
  %v31 = vadd.f32 %v21, %v29
  %v32 = vadd.f32 %v22, %v30
  %v33 = vrcp.pop 10.0
  %v34 = vmul.f32 %v31, %v33
  %v35 = vmul.f32 %v32, %v33
  %36 = vst [vmem:[%s2] sm:$0xff] %v34
  %37 = vst [vmem:[%s2 + $0x8] sm:$0xff] %v35
  // Predicated region
  $region10: #{matadd.1} parent=0 // pred_check
    _
  $region11: #{matadd.1} parent=0 // pred_check_branch
    %39 = sbr.rel (0) target = $region13
  $region12: #{matadd.1} parent=0 // pred_region
    _
  $region13: #{matadd.1} parent=0 // pred_fallthru
    _
  // Predicated region
  $region14: #{matadd.1} parent=0 // pred_check
    _
  $region15: #{matadd.1} parent=0 // pred_check_branch
    %41 = sbr.rel (0) target = $region17
  $region16: #{matadd.1} parent=0 // pred_region
    _
  $region17: #{matadd.1} parent=0 // pred_fallthru
    _

</llo_original>
